<compile_context>
chip_gen: v5e
topology: v5e:2x2
jax: 0.10.0
libtpu: 0.0.40
codegen_flags: <defaults>
</compile_context>

<pallas_src>
import jax
import jax.numpy as jnp
from jax import lax
from jax.experimental import pallas as pl
from jax.experimental.pallas import tpu as pltpu

# Hyper-parameters (match PhysicsLoss.__init__ defaults).
FPS = 25.0
VELOCITY_THRESHOLD = 5.0   # unused in forward (kept for parity with the module)
EPSILON = 1e-8             # unused: the reference divides without an epsilon
LOSS_SCALE = 1e-7


def _first_argmax_f32(h, size):
    """First-occurrence argmax along the last (lane) axis -> (..., 1) float32."""
    mx = jnp.max(h, axis=-1, keepdims=True)
    ii = lax.broadcasted_iota(jnp.int32, h.shape, h.ndim - 1)
    idx = jnp.min(jnp.where(h == mx, ii, size), axis=-1, keepdims=True)
    return idx.astype(jnp.float32)


def physics_loss_kernel(hx_ref, hy_ref, lab_ref, out_ref):
    TB, N, W = hx_ref.shape
    H = hy_ref.shape[2]

    hx = hx_ref[...]                         # (TB, N, W) native dtype
    hy = hy_ref[...]                         # (TB, N, H)
    lab = lab_ref[...].astype(jnp.float32)   # (TB, N, 2)

    # --- heatmap -> predicted (x, y) coordinates (kept as 1-lane columns; they
    # become two columns of the fused compaction RHS, no stack/concat needed).
    px = _first_argmax_f32(hx, W)            # (TB, N, 1)
    py = _first_argmax_f32(hy, H)            # (TB, N, 1)

    # --- valid mask: (labels != 0).all(dim=-1) -----------------------------
    mask_f = jnp.logical_and(lab[:, :, 0:1] != 0.0,
                             lab[:, :, 1:2] != 0.0).astype(jnp.float32)  # (TB,N,1)
    k = jnp.sum(mask_f, axis=1, keepdims=True)                           # (TB,1,1)

    # --- compaction selector sel[b, r, t] = 1 iff frame t is the (r+1)-th
    # valid frame.  Built from inclusive/exclusive valid-frame counts:
    # pure VPU compares + sublane reductions (no matmul cumsum).
    s_row = lax.broadcasted_iota(jnp.int32, (TB, N, N), 1)   # s / r on sublanes
    t_col = lax.broadcasted_iota(jnp.int32, (TB, N, N), 2)   # t on lanes
    incl = jnp.sum(jnp.where(s_row <= t_col, mask_f, 0.0),
                   axis=1, keepdims=True)                    # (TB,1,N) #valid s<=t
    excl = jnp.sum(jnp.where(s_row < t_col, mask_f, 0.0),
                   axis=1, keepdims=True)                    # (TB,1,N) #valid s< t
    r_row = s_row.astype(jnp.float32)                        # reuse iota (row rank r)
    sel = jnp.logical_and(excl == r_row,
                          incl == r_row + 1.0).astype(jnp.float32)  # (TB, N_r, N_t)

    # --- fused compaction: one batched MXU matmul gathers
    # [frame_idx, pred_x, pred_y, label_x, label_y] of the valid frames to the
    # front (zero-padded tail), exactly like the reference's boolean indexing.
    tvec = lax.broadcasted_iota(jnp.int32, (TB, N, 1), 1).astype(jnp.float32)
    vals = jnp.concatenate([tvec, px, py, lab], axis=2)      # (TB, N, 5)
    cc = jnp.einsum('brt,btd->brd', sel, vals,
                    preferred_element_type=jnp.float32,
                    precision=lax.Precision.HIGHEST)         # (TB, N, 5) exact select

    ci = cc[:, :, 0:1]        # compacted original frame indices
    cc_pred = cc[:, :, 1:3]   # compacted predicted coords
    cc_act = cc[:, :, 3:5]    # compacted label coords

    # --- time intervals between consecutive valid frames (guard padded tail)
    dt = (ci[:, 1:, :] - ci[:, :-1, :]) / FPS                # (TB, N-1, 1)
    j1 = lax.broadcasted_iota(jnp.int32, (TB, N - 1, 1), 1).astype(jnp.float32)
    vel_valid = j1 < (k - 1.0)                               # (TB, N-1, 1)
    safe_dt = jnp.where(vel_valid, dt, 1.0)

    dt2 = dt[:, 1:, :]                                       # (TB, N-2, 1)
    j2 = lax.broadcasted_iota(jnp.int32, (TB, N - 2, 1), 1).astype(jnp.float32)
    acc_valid = j2 < (k - 2.0)
    safe_dt2 = jnp.where(acc_valid, dt2, 1.0)

    def vel_acc(coords):
        dpos = coords[:, 1:, :] - coords[:, :-1, :]          # (TB, N-1, 2)
        vel = jnp.where(vel_valid, dpos / safe_dt, 0.0)      # zero-padded (torch parity)
        dvel = vel[:, 1:, :] - vel[:, :-1, :]                # (TB, N-2, 2)
        acc = jnp.where(acc_valid, dvel / safe_dt2, 0.0)
        return vel, acc

    vel_p, acc_p = vel_acc(cc_pred)
    vel_a, acc_a = vel_acc(cc_act)

    # --- masked squared error.  The masks are positional in the ORIGINAL
    # frame order (valid_mask[:,1:] / valid_mask[:,2:]) applied to the
    # compacted sequences, exactly mirroring the PyTorch reference.
    m1 = mask_f[:, 1:, :]                                    # (TB, N-1, 1)
    m2 = mask_f[:, 2:, :]                                    # (TB, N-2, 1)
    sv = jnp.sum((vel_p - vel_a) ** 2 * m1, keepdims=True)   # (1,1,1) partial sums
    cv = jnp.sum(m1, keepdims=True)                          # over the TB batches
    sa = jnp.sum((acc_p - acc_a) ** 2 * m2, keepdims=True)
    ca = jnp.sum(m2, keepdims=True)

    # Pack the 4 partial sums via a lane-iota select (no lane-concat shuffle).
    lane = lax.broadcasted_iota(jnp.int32, (1, 1, 4), 2)
    out = jnp.where(lane == 0, sv,
          jnp.where(lane == 1, cv,
          jnp.where(lane == 2, sa, ca)))
    out_ref[...] = out


def _auto_batch_tile(B, N, W, H, itemsize, requested):
    """Clamp the batch tile so double-buffered input tiles stay well inside the
    default scoped-VMEM limit on v5e/v6e/v7x (~8 MiB target for inputs)."""
    per_batch = N * (W + H + 2) * itemsize
    budget = 8 * 1024 * 1024
    cap = max(1, budget // max(1, 2 * per_batch))   # 2x for double buffering
    return int(max(1, min(requested, cap, B)))


def physics_loss(heatmapsx, heatmapsy, labels, *, batch_tile=8):
    B, N, W = heatmapsx.shape
    H = heatmapsy.shape[2]

    tb = _auto_batch_tile(B, N, W, H, heatmapsx.dtype.itemsize, batch_tile)
    g = -(-B // tb)          # number of grid steps
    bp = g * tb
    if bp != B:
        # Pad with zero labels -> fully masked out, contributes nothing.
        pad = bp - B
        heatmapsx = jnp.pad(heatmapsx, ((0, pad), (0, 0), (0, 0)))
        heatmapsy = jnp.pad(heatmapsy, ((0, pad), (0, 0), (0, 0)))
        labels = jnp.pad(labels, ((0, pad), (0, 0), (0, 0)))

    partials = pl.pallas_call(
        physics_loss_kernel,
        out_shape=jax.ShapeDtypeStruct((g, 1, 4), jnp.float32),
        grid=(g,),
        in_specs=[
            pl.BlockSpec((tb, N, W), lambda i: (i, 0, 0)),
            pl.BlockSpec((tb, N, H), lambda i: (i, 0, 0)),
            pl.BlockSpec((tb, N, 2), lambda i: (i, 0, 0)),
        ],
        out_specs=pl.BlockSpec((1, 1, 4), lambda i: (i, 0, 0)),
        compiler_params=pltpu.CompilerParams(
            dimension_semantics=("parallel",)),   # batch tiles are independent
    )(heatmapsx, heatmapsy, labels)

    # Tiny glue: sum the B//TB partial rows + final scalar divisions.
    sums = jnp.sum(partials, axis=(0, 1))          # (4,)
    velocity_loss = sums[0] / sums[1]              # reference has no epsilon guard
    acceleration_loss = sums[2] / sums[3]
    return LOSS_SCALE * (velocity_loss + 0.1 * acceleration_loss)


if __name__ == "__main__":
    key = jax.random.PRNGKey(0)
    k1, k2, k3 = jax.random.split(key, 3)

    B, N, W, H = 2, 8, 64, 48
    heatmapsx = jax.random.normal(k1, (B, N, W), dtype=jnp.float32)
    heatmapsy = jax.random.normal(k2, (B, N, H), dtype=jnp.float32)
    labels = jax.random.uniform(k3, (B, N, 2), minval=1.0, maxval=40.0,
                                dtype=jnp.float32)
    # Mark a couple of frames as missing ([0, 0]) to exercise the valid mask.
    labels = labels.at[0, 2, :].set(0.0)
    labels = labels.at[1, 5, :].set(0.0)

    loss = jax.jit(physics_loss)(heatmapsx, heatmapsy, labels)
    jax.block_until_ready(loss)
    print("KERNEL_OK")
</pallas_src>

<mosaic_0001>
module attributes {stable_mosaic.version = 11 : i64} {
  func.func @physics_loss_kernel(%arg0: i32, %arg1: memref<2x8x64xf32, #tpu.memory_space<vmem>>, %arg2: memref<2x8x48xf32, #tpu.memory_space<vmem>>, %arg3: memref<2x8x2xf32, #tpu.memory_space<vmem>>, %arg4: memref<1x1x4xf32, #tpu.memory_space<vmem>>) attributes {dimension_semantics = [#tpu.dimension_semantics<parallel>], iteration_bounds = array<i64: 1>, scalar_prefetch = 0 : i64, scratch_operands = 0 : i64, tpu.core_type = #tpu.core_type<tc>, window_params = [{transform_indices = @transform_0, window_bounds = array<i64: 2, 8, 64>}, {transform_indices = @transform_1, window_bounds = array<i64: 2, 8, 48>}, {transform_indices = @transform_2, window_bounds = array<i64: 2, 8, 2>}, {transform_indices = @transform_3, window_bounds = array<i64: 1, 1, 4>}]} {
    %c0 = arith.constant 0 : index
    %c0_0 = arith.constant 0 : index
    %c0_1 = arith.constant 0 : index
    %0 = vector.load %arg1[%c0, %c0_0, %c0_1] : memref<2x8x64xf32, #tpu.memory_space<vmem>>, vector<2x8x64xf32>
    %c0_2 = arith.constant 0 : index
    %c0_3 = arith.constant 0 : index
    %c0_4 = arith.constant 0 : index
    %1 = vector.load %arg2[%c0_2, %c0_3, %c0_4] : memref<2x8x48xf32, #tpu.memory_space<vmem>>, vector<2x8x48xf32>
    %c0_5 = arith.constant 0 : index
    %c0_6 = arith.constant 0 : index
    %c0_7 = arith.constant 0 : index
    %2 = vector.load %arg3[%c0_5, %c0_6, %c0_7] : memref<2x8x2xf32, #tpu.memory_space<vmem>>, vector<2x8x2xf32>
    %cst = arith.constant dense<0xFF800000> : vector<2x8xf32>
    %3 = vector.multi_reduction <maximumf>, %0, %cst [2] : vector<2x8x64xf32> to vector<2x8xf32>
    %4 = vector.shape_cast %3 : vector<2x8xf32> to vector<2x8x1xf32>
    %5 = tpu.iota {dimensions = array<i32: 2>} : vector<2x8x64xi32>
    %6 = vector.broadcast %4 : vector<2x8x1xf32> to vector<2x8x64xf32>
    %7 = arith.cmpf oeq, %0, %6 : vector<2x8x64xf32>
    %c64_i32 = arith.constant 64 : i32
    %8 = vector.broadcast %c64_i32 : i32 to vector<2x8x64xi32>
    %9 = arith.select %7, %5, %8 : vector<2x8x64xi1>, vector<2x8x64xi32>
    %cst_8 = arith.constant dense<2147483647> : vector<2x8xi32>
    %10 = vector.multi_reduction <minsi>, %9, %cst_8 [2] : vector<2x8x64xi32> to vector<2x8xi32>
    %11 = vector.shape_cast %10 : vector<2x8xi32> to vector<2x8x1xi32>
    %12 = arith.sitofp %11 : vector<2x8x1xi32> to vector<2x8x1xf32>
    %cst_9 = arith.constant dense<0xFF800000> : vector<2x8xf32>
    %13 = vector.multi_reduction <maximumf>, %1, %cst_9 [2] : vector<2x8x48xf32> to vector<2x8xf32>
    %14 = vector.shape_cast %13 : vector<2x8xf32> to vector<2x8x1xf32>
    %15 = tpu.iota {dimensions = array<i32: 2>} : vector<2x8x48xi32>
    %16 = vector.broadcast %14 : vector<2x8x1xf32> to vector<2x8x48xf32>
    %17 = arith.cmpf oeq, %1, %16 : vector<2x8x48xf32>
    %c48_i32 = arith.constant 48 : i32
    %18 = vector.broadcast %c48_i32 : i32 to vector<2x8x48xi32>
    %19 = arith.select %17, %15, %18 : vector<2x8x48xi1>, vector<2x8x48xi32>
    %cst_10 = arith.constant dense<2147483647> : vector<2x8xi32>
    %20 = vector.multi_reduction <minsi>, %19, %cst_10 [2] : vector<2x8x48xi32> to vector<2x8xi32>
    %21 = vector.shape_cast %20 : vector<2x8xi32> to vector<2x8x1xi32>
    %22 = arith.sitofp %21 : vector<2x8x1xi32> to vector<2x8x1xf32>
    %23 = vector.extract_strided_slice %2 {offsets = [0, 0, 0], sizes = [2, 8, 1], strides = [1, 1, 1]} : vector<2x8x2xf32> to vector<2x8x1xf32>
    %cst_11 = arith.constant 0.000000e+00 : f32
    %24 = vector.broadcast %cst_11 : f32 to vector<2x8x1xf32>
    %25 = arith.cmpf one, %23, %24 : vector<2x8x1xf32>
    %26 = vector.extract_strided_slice %2 {offsets = [0, 0, 1], sizes = [2, 8, 1], strides = [1, 1, 1]} : vector<2x8x2xf32> to vector<2x8x1xf32>
    %cst_12 = arith.constant 0.000000e+00 : f32
    %27 = vector.broadcast %cst_12 : f32 to vector<2x8x1xf32>
    %28 = arith.cmpf one, %26, %27 : vector<2x8x1xf32>
    %29 = arith.andi %25, %28 : vector<2x8x1xi1>
    %30 = arith.extui %29 : vector<2x8x1xi1> to vector<2x8x1xi32>
    %31 = arith.sitofp %30 : vector<2x8x1xi32> to vector<2x8x1xf32>
    %cst_13 = arith.constant dense<0.000000e+00> : vector<2x1xf32>
    %32 = vector.multi_reduction <add>, %31, %cst_13 [1] : vector<2x8x1xf32> to vector<2x1xf32>
    %33 = vector.shape_cast %32 : vector<2x1xf32> to vector<2x1x1xf32>
    %34 = tpu.iota {dimensions = array<i32: 1>} : vector<2x8x8xi32>
    %35 = tpu.iota {dimensions = array<i32: 2>} : vector<2x8x8xi32>
    %36 = arith.cmpi sle, %34, %35 : vector<2x8x8xi32>
    %cst_14 = arith.constant 0.000000e+00 : f32
    %37 = vector.shape_cast %31 : vector<2x8x1xf32> to vector<2x8x1xf32>
    %38 = vector.broadcast %37 : vector<2x8x1xf32> to vector<2x8x8xf32>
    %39 = vector.broadcast %cst_14 : f32 to vector<2x8x8xf32>
    %40 = arith.select %36, %38, %39 : vector<2x8x8xi1>, vector<2x8x8xf32>
    %cst_15 = arith.constant dense<0.000000e+00> : vector<2x8xf32>
    %41 = vector.multi_reduction <add>, %40, %cst_15 [1] : vector<2x8x8xf32> to vector<2x8xf32>
    %42 = vector.shape_cast %41 : vector<2x8xf32> to vector<2x1x8xf32>
    %43 = arith.cmpi slt, %34, %35 : vector<2x8x8xi32>
    %cst_16 = arith.constant 0.000000e+00 : f32
    %44 = vector.shape_cast %31 : vector<2x8x1xf32> to vector<2x8x1xf32>
    %45 = vector.broadcast %44 : vector<2x8x1xf32> to vector<2x8x8xf32>
    %46 = vector.broadcast %cst_16 : f32 to vector<2x8x8xf32>
    %47 = arith.select %43, %45, %46 : vector<2x8x8xi1>, vector<2x8x8xf32>
    %cst_17 = arith.constant dense<0.000000e+00> : vector<2x8xf32>
    %48 = vector.multi_reduction <add>, %47, %cst_17 [1] : vector<2x8x8xf32> to vector<2x8xf32>
    %49 = vector.shape_cast %48 : vector<2x8xf32> to vector<2x1x8xf32>
    %50 = arith.sitofp %34 : vector<2x8x8xi32> to vector<2x8x8xf32>
    %51 = vector.broadcast %49 : vector<2x1x8xf32> to vector<2x8x8xf32>
    %52 = arith.cmpf oeq, %51, %50 : vector<2x8x8xf32>
    %cst_18 = arith.constant 1.000000e+00 : f32
    %53 = vector.broadcast %cst_18 : f32 to vector<2x8x8xf32>
    %54 = arith.addf %50, %53 : vector<2x8x8xf32>
    %55 = vector.broadcast %42 : vector<2x1x8xf32> to vector<2x8x8xf32>
    %56 = arith.cmpf oeq, %55, %54 : vector<2x8x8xf32>
    %57 = arith.andi %52, %56 : vector<2x8x8xi1>
    %58 = arith.extui %57 : vector<2x8x8xi1> to vector<2x8x8xi32>
    %59 = arith.sitofp %58 : vector<2x8x8xi32> to vector<2x8x8xf32>
    %60 = tpu.iota {dimensions = array<i32: 1>} : vector<2x8x1xi32>
    %61 = arith.sitofp %60 : vector<2x8x1xi32> to vector<2x8x1xf32>
    %62 = tpu.concatenate %61, %12, %22, %2 in 2 : vector<2x8x1xf32>, vector<2x8x1xf32>, vector<2x8x1xf32>, vector<2x8x2xf32> -> vector<2x8x5xf32>
    "tpu.trace_start"() <{level = 10 : i32, message = "brt,btd->brd"}> : () -> ()
    %cst_19 = arith.constant dense<0.000000e+00> : vector<2x8x5xf32>
    %63 = tpu.matmul %59, %62, %cst_19 {dimension_numbers = #tpu.dot_dimension_numbers<[2], [1], [1], [2], [0, 0, 0, 1, 1, 2], [0], [0]>, precision = #tpu.contract_precision<fp32>} : vector<2x8x8xf32>, vector<2x8x5xf32>, vector<2x8x5xf32> -> vector<2x8x5xf32>
    "tpu.trace_stop"() : () -> ()
    %64 = vector.extract_strided_slice %63 {offsets = [0, 0, 0], sizes = [2, 8, 1], strides = [1, 1, 1]} : vector<2x8x5xf32> to vector<2x8x1xf32>
    %65 = vector.extract_strided_slice %63 {offsets = [0, 0, 1], sizes = [2, 8, 2], strides = [1, 1, 1]} : vector<2x8x5xf32> to vector<2x8x2xf32>
    %66 = vector.extract_strided_slice %63 {offsets = [0, 0, 3], sizes = [2, 8, 2], strides = [1, 1, 1]} : vector<2x8x5xf32> to vector<2x8x2xf32>
    %67 = vector.extract_strided_slice %64 {offsets = [0, 1, 0], sizes = [2, 7, 1], strides = [1, 1, 1]} : vector<2x8x1xf32> to vector<2x7x1xf32>
    %68 = vector.extract_strided_slice %64 {offsets = [0, 0, 0], sizes = [2, 7, 1], strides = [1, 1, 1]} : vector<2x8x1xf32> to vector<2x7x1xf32>
    %69 = arith.subf %67, %68 : vector<2x7x1xf32>
    %cst_20 = arith.constant 2.500000e+01 : f32
    %70 = vector.broadcast %cst_20 : f32 to vector<2x7x1xf32>
    %71 = arith.divf %69, %70 : vector<2x7x1xf32>
    %72 = tpu.iota {dimensions = array<i32: 1>} : vector<2x7x1xi32>
    %73 = arith.sitofp %72 : vector<2x7x1xi32> to vector<2x7x1xf32>
    %cst_21 = arith.constant 1.000000e+00 : f32
    %74 = vector.broadcast %cst_21 : f32 to vector<2x1x1xf32>
    %75 = arith.subf %33, %74 : vector<2x1x1xf32>
    %76 = vector.broadcast %75 : vector<2x1x1xf32> to vector<2x7x1xf32>
    %77 = arith.cmpf olt, %73, %76 : vector<2x7x1xf32>
    %cst_22 = arith.constant 1.000000e+00 : f32
    %78 = vector.broadcast %cst_22 : f32 to vector<2x7x1xf32>
    %79 = arith.select %77, %71, %78 : vector<2x7x1xi1>, vector<2x7x1xf32>
    %80 = vector.extract_strided_slice %71 {offsets = [0, 1, 0], sizes = [2, 6, 1], strides = [1, 1, 1]} : vector<2x7x1xf32> to vector<2x6x1xf32>
    %81 = tpu.iota {dimensions = array<i32: 1>} : vector<2x6x1xi32>
    %82 = arith.sitofp %81 : vector<2x6x1xi32> to vector<2x6x1xf32>
    %cst_23 = arith.constant 2.000000e+00 : f32
    %83 = vector.broadcast %cst_23 : f32 to vector<2x1x1xf32>
    %84 = arith.subf %33, %83 : vector<2x1x1xf32>
    %85 = vector.broadcast %84 : vector<2x1x1xf32> to vector<2x6x1xf32>
    %86 = arith.cmpf olt, %82, %85 : vector<2x6x1xf32>
    %cst_24 = arith.constant 1.000000e+00 : f32
    %87 = vector.broadcast %cst_24 : f32 to vector<2x6x1xf32>
    %88 = arith.select %86, %80, %87 : vector<2x6x1xi1>, vector<2x6x1xf32>
    %89 = vector.extract_strided_slice %65 {offsets = [0, 1, 0], sizes = [2, 7, 2], strides = [1, 1, 1]} : vector<2x8x2xf32> to vector<2x7x2xf32>
    %90 = vector.extract_strided_slice %65 {offsets = [0, 0, 0], sizes = [2, 7, 2], strides = [1, 1, 1]} : vector<2x8x2xf32> to vector<2x7x2xf32>
    %91 = arith.subf %89, %90 : vector<2x7x2xf32>
    %92 = vector.broadcast %79 : vector<2x7x1xf32> to vector<2x7x2xf32>
    %93 = arith.divf %91, %92 : vector<2x7x2xf32>
    %cst_25 = arith.constant 0.000000e+00 : f32
    %94 = vector.shape_cast %77 : vector<2x7x1xi1> to vector<2x7x1xi1>
    %95 = vector.broadcast %94 : vector<2x7x1xi1> to vector<2x7x2xi1>
    %96 = vector.broadcast %cst_25 : f32 to vector<2x7x2xf32>
    %97 = arith.select %95, %93, %96 : vector<2x7x2xi1>, vector<2x7x2xf32>
    %98 = vector.extract_strided_slice %97 {offsets = [0, 1, 0], sizes = [2, 6, 2], strides = [1, 1, 1]} : vector<2x7x2xf32> to vector<2x6x2xf32>
    %99 = vector.extract_strided_slice %97 {offsets = [0, 0, 0], sizes = [2, 6, 2], strides = [1, 1, 1]} : vector<2x7x2xf32> to vector<2x6x2xf32>
    %100 = arith.subf %98, %99 : vector<2x6x2xf32>
    %101 = vector.broadcast %88 : vector<2x6x1xf32> to vector<2x6x2xf32>
    %102 = arith.divf %100, %101 : vector<2x6x2xf32>
    %cst_26 = arith.constant 0.000000e+00 : f32
    %103 = vector.shape_cast %86 : vector<2x6x1xi1> to vector<2x6x1xi1>
    %104 = vector.broadcast %103 : vector<2x6x1xi1> to vector<2x6x2xi1>
    %105 = vector.broadcast %cst_26 : f32 to vector<2x6x2xf32>
    %106 = arith.select %104, %102, %105 : vector<2x6x2xi1>, vector<2x6x2xf32>
    %107 = vector.extract_strided_slice %66 {offsets = [0, 1, 0], sizes = [2, 7, 2], strides = [1, 1, 1]} : vector<2x8x2xf32> to vector<2x7x2xf32>
    %108 = vector.extract_strided_slice %66 {offsets = [0, 0, 0], sizes = [2, 7, 2], strides = [1, 1, 1]} : vector<2x8x2xf32> to vector<2x7x2xf32>
    %109 = arith.subf %107, %108 : vector<2x7x2xf32>
    %110 = vector.broadcast %79 : vector<2x7x1xf32> to vector<2x7x2xf32>
    %111 = arith.divf %109, %110 : vector<2x7x2xf32>
    %cst_27 = arith.constant 0.000000e+00 : f32
    %112 = vector.shape_cast %77 : vector<2x7x1xi1> to vector<2x7x1xi1>
    %113 = vector.broadcast %112 : vector<2x7x1xi1> to vector<2x7x2xi1>
    %114 = vector.broadcast %cst_27 : f32 to vector<2x7x2xf32>
    %115 = arith.select %113, %111, %114 : vector<2x7x2xi1>, vector<2x7x2xf32>
    %116 = vector.extract_strided_slice %115 {offsets = [0, 1, 0], sizes = [2, 6, 2], strides = [1, 1, 1]} : vector<2x7x2xf32> to vector<2x6x2xf32>
    %117 = vector.extract_strided_slice %115 {offsets = [0, 0, 0], sizes = [2, 6, 2], strides = [1, 1, 1]} : vector<2x7x2xf32> to vector<2x6x2xf32>
    %118 = arith.subf %116, %117 : vector<2x6x2xf32>
    %119 = vector.broadcast %88 : vector<2x6x1xf32> to vector<2x6x2xf32>
    %120 = arith.divf %118, %119 : vector<2x6x2xf32>
    %cst_28 = arith.constant 0.000000e+00 : f32
    %121 = vector.shape_cast %86 : vector<2x6x1xi1> to vector<2x6x1xi1>
    %122 = vector.broadcast %121 : vector<2x6x1xi1> to vector<2x6x2xi1>
    %123 = vector.broadcast %cst_28 : f32 to vector<2x6x2xf32>
    %124 = arith.select %122, %120, %123 : vector<2x6x2xi1>, vector<2x6x2xf32>
    %125 = vector.extract_strided_slice %31 {offsets = [0, 1, 0], sizes = [2, 7, 1], strides = [1, 1, 1]} : vector<2x8x1xf32> to vector<2x7x1xf32>
    %126 = vector.extract_strided_slice %31 {offsets = [0, 2, 0], sizes = [2, 6, 1], strides = [1, 1, 1]} : vector<2x8x1xf32> to vector<2x6x1xf32>
    %127 = arith.subf %97, %115 : vector<2x7x2xf32>
    %128 = arith.mulf %127, %127 : vector<2x7x2xf32>
    %129 = vector.broadcast %125 : vector<2x7x1xf32> to vector<2x7x2xf32>
    %130 = arith.mulf %128, %129 : vector<2x7x2xf32>
    %131 = vector.shape_cast %130 : vector<2x7x2xf32> to vector<1x2x7x2xf32>
    %cst_29 = arith.constant dense<0.000000e+00> : vector<1xf32>
    %132 = vector.multi_reduction <add>, %131, %cst_29 [1, 2, 3] : vector<1x2x7x2xf32> to vector<1xf32>
    %133 = vector.shape_cast %132 : vector<1xf32> to vector<1x1x1x1xf32>
    %134 = vector.extract %133[0, 0, 0, 0] : f32 from vector<1x1x1x1xf32>
    %135 = vector.broadcast %134 : f32 to vector<1x1x1xf32>
    %136 = vector.shape_cast %125 : vector<2x7x1xf32> to vector<1x2x7x1xf32>
    %cst_30 = arith.constant dense<0.000000e+00> : vector<1xf32>
    %137 = vector.multi_reduction <add>, %136, %cst_30 [1, 2, 3] : vector<1x2x7x1xf32> to vector<1xf32>
    %138 = vector.shape_cast %137 : vector<1xf32> to vector<1x1x1x1xf32>
    %139 = vector.extract %138[0, 0, 0, 0] : f32 from vector<1x1x1x1xf32>
    %140 = vector.broadcast %139 : f32 to vector<1x1x1xf32>
    %141 = arith.subf %106, %124 : vector<2x6x2xf32>
    %142 = arith.mulf %141, %141 : vector<2x6x2xf32>
    %143 = vector.broadcast %126 : vector<2x6x1xf32> to vector<2x6x2xf32>
    %144 = arith.mulf %142, %143 : vector<2x6x2xf32>
    %145 = vector.shape_cast %144 : vector<2x6x2xf32> to vector<1x2x6x2xf32>
    %cst_31 = arith.constant dense<0.000000e+00> : vector<1xf32>
    %146 = vector.multi_reduction <add>, %145, %cst_31 [1, 2, 3] : vector<1x2x6x2xf32> to vector<1xf32>
    %147 = vector.shape_cast %146 : vector<1xf32> to vector<1x1x1x1xf32>
    %148 = vector.extract %147[0, 0, 0, 0] : f32 from vector<1x1x1x1xf32>
    %149 = vector.broadcast %148 : f32 to vector<1x1x1xf32>
    %150 = vector.shape_cast %126 : vector<2x6x1xf32> to vector<1x2x6x1xf32>
    %cst_32 = arith.constant dense<0.000000e+00> : vector<1xf32>
    %151 = vector.multi_reduction <add>, %150, %cst_32 [1, 2, 3] : vector<1x2x6x1xf32> to vector<1xf32>
    %152 = vector.shape_cast %151 : vector<1xf32> to vector<1x1x1x1xf32>
    %153 = vector.extract %152[0, 0, 0, 0] : f32 from vector<1x1x1x1xf32>
    %154 = vector.broadcast %153 : f32 to vector<1x1x1xf32>
    %155 = tpu.iota {dimensions = array<i32: 2>} : vector<1x1x4xi32>
    %c0_i32 = arith.constant 0 : i32
    %156 = vector.broadcast %c0_i32 : i32 to vector<1x1x4xi32>
    %157 = arith.cmpi eq, %155, %156 : vector<1x1x4xi32>
    %c1_i32 = arith.constant 1 : i32
    %158 = vector.broadcast %c1_i32 : i32 to vector<1x1x4xi32>
    %159 = arith.cmpi eq, %155, %158 : vector<1x1x4xi32>
    %c2_i32 = arith.constant 2 : i32
    %160 = vector.broadcast %c2_i32 : i32 to vector<1x1x4xi32>
    %161 = arith.cmpi eq, %155, %160 : vector<1x1x4xi32>
    %162 = vector.shape_cast %149 : vector<1x1x1xf32> to vector<1x1x1xf32>
    %163 = vector.broadcast %162 : vector<1x1x1xf32> to vector<1x1x4xf32>
    %164 = vector.shape_cast %154 : vector<1x1x1xf32> to vector<1x1x1xf32>
    %165 = vector.broadcast %164 : vector<1x1x1xf32> to vector<1x1x4xf32>
    %166 = arith.select %161, %163, %165 : vector<1x1x4xi1>, vector<1x1x4xf32>
    %167 = vector.shape_cast %140 : vector<1x1x1xf32> to vector<1x1x1xf32>
    %168 = vector.broadcast %167 : vector<1x1x1xf32> to vector<1x1x4xf32>
    %169 = arith.select %159, %168, %166 : vector<1x1x4xi1>, vector<1x1x4xf32>
    %170 = vector.shape_cast %135 : vector<1x1x1xf32> to vector<1x1x1xf32>
    %171 = vector.broadcast %170 : vector<1x1x1xf32> to vector<1x1x4xf32>
    %172 = arith.select %157, %171, %169 : vector<1x1x4xi1>, vector<1x1x4xf32>
    %c0_33 = arith.constant 0 : index
    %c0_34 = arith.constant 0 : index
    %c0_35 = arith.constant 0 : index
    %173 = vector.load %arg4[%c0_33, %c0_34, %c0_35] : memref<1x1x4xf32, #tpu.memory_space<vmem>>, vector<1x1x4xf32>
    tpu.vector_store %arg4[%c0_33, %c0_34, %c0_35], %172 {strides = array<i32>} : memref<1x1x4xf32, #tpu.memory_space<vmem>>, vector<1x1x4xf32>,
    return
  }
  func.func @transform_0(%arg0: i32) -> (i32, i32, i32) {
    %c0_i32 = arith.constant 0 : i32
    %c0_i32_0 = arith.constant 0 : i32
    %c0_i32_1 = arith.constant 0 : i32
    return %arg0, %c0_i32, %c0_i32_0 : i32, i32, i32
  }
  func.func @transform_1(%arg0: i32) -> (i32, i32, i32) {
    %c0_i32 = arith.constant 0 : i32
    %c0_i32_0 = arith.constant 0 : i32
    %c0_i32_1 = arith.constant 0 : i32
    return %arg0, %c0_i32, %c0_i32_0 : i32, i32, i32
  }
  func.func @transform_2(%arg0: i32) -> (i32, i32, i32) {
    %c0_i32 = arith.constant 0 : i32
    %c0_i32_0 = arith.constant 0 : i32
    %c0_i32_1 = arith.constant 0 : i32
    return %arg0, %c0_i32, %c0_i32_0 : i32, i32, i32
  }
  func.func @transform_3(%arg0: i32) -> (i32, i32, i32) {
    %c0_i32 = arith.constant 0 : i32
    %c0_i32_0 = arith.constant 0 : i32
    %c0_i32_1 = arith.constant 0 : i32
    return %arg0, %c0_i32, %c0_i32_0 : i32, i32, i32
  }
}

</mosaic_0001>

<llo_original>
// kernel: physics_loss.1
$region0: #{physics_loss.1}
  #allocation0 [shape = 'u32[]', space=smem, size = 0x4, offset = 0x4, fixed_abs, tag = 'smem constant byte address 0x4 - core index']
  #allocation1 [shape = 'u32[72,128]{1,0:T(1,128)}', space=vmem, size = 0x9000, scoped, tag = 'internal scratch']
  %s0 = inlined_call_operand.vmem [shape: f32[2,8,64], index: 0, kind: input, shape index: {}]
  %s1 = inlined_call_operand.hbm [shape: f32[2,8,48], index: 1, kind: input, shape index: {}]
  %s2 = inlined_call_operand.vmem [shape: f32[2,8,2], index: 2, kind: input, shape index: {}]
  %s3 = inlined_call_operand.vmem [shape: f32[1,1,4], index: 3, kind: output, shape index: {}]
  %s4 = sld [smem:[#allocation0]]
  $region26: #{physics_loss.1} parent=0
    _
  %s6 = ssub.s32 1, %s4
  %s7 = scalar_select 0, %s6, %s4
  $region1: #{physics_loss.1} parent=0
    #allocation2 [shape = 'u8[8192]{0}', space=vmem, size = 0x2000, scoped, tag = 'input window, operand 1, single buffered']
    #allocation3 [shape = 's32[1]{0}', space=sflag, size = 0x4, scoped, tag = 'scoped memory for physics_loss.1']
    %8 = vsyncpa [#allocation3], 0
    // Predicated region
    $region2: #{physics_loss.1} parent=1 // pred_check
      _
    $region3: #{physics_loss.1} parent=1 // pred_check_branch
      %10 = sbr.rel (0) target = $region5
    $region4: #{physics_loss.1} parent=1 // pred_region
      _
    $region5: #{physics_loss.1} parent=1 // pred_fallthru
      _
    // Predicated region
    $region6: #{physics_loss.1} parent=1 // pred_check
      _
    $region7: #{physics_loss.1} parent=1 // pred_check_branch
      %12 = sbr.rel (0) target = $region9
    $region8: #{physics_loss.1} parent=1 // pred_region
      %14 = vsyncadd [#allocation3], 0
      %s15 = sshll.u32 %s1, 4
      %s16 = int_to_ptr.hbm [resolvable:$true] %s15
      %s17 = sshll.u32 [#allocation2], 4
      %s18 = int_to_ptr.vmem [resolvable:$true] %s17
      %23 = dma.hbm_to_vmem [thread:$0]  %s16, 256, %s18, [#allocation3], 128, 128, 8
    $region9: #{physics_loss.1} parent=1 // pred_fallthru
      _
    // Predicated region
    $region10: #{physics_loss.1} parent=1 // pred_check
      _
    $region11: #{physics_loss.1} parent=1 // pred_check_branch
      %25 = sbr.rel (0) target = $region13
    $region12: #{physics_loss.1} parent=1 // pred_region
      _
    $region13: #{physics_loss.1} parent=1 // pred_fallthru
      _
    // Predicated region
    $region14: #{physics_loss.1} parent=1 // pred_check
      _
    $region15: #{physics_loss.1} parent=1 // pred_check_branch
      %27 = sbr.rel (0) target = $region17
    $region16: #{physics_loss.1} parent=1 // pred_region
      %29 = dma.done [#allocation3], 256
    $region17: #{physics_loss.1} parent=1 // pred_fallthru
      _
    %v30 = vld [vmem:[%s0] sm:$0xff]
    %v31 = vld [vmem:[%s0 + $0x8] sm:$0xff]
    %v32 = vld [vmem:[#allocation2] sm:$0xff]
    %v33 = vld [vmem:[#allocation2 + $0x8] sm:$0xff]
    %v34 = vld [vmem:[%s2] sm:$0xff]
    %v35 = vld [vmem:[%s2 + $0x8] sm:$0xff]
    %vm36 = vcmask 523264
    %v37 = vsel %vm36, %v30, -inf
    %38 = vmax.xlane.f32.xlu0 %v37
    %v39 = vpop.xlane.xlu0 %38
    %v40 = vsel %vm36, %v31, -inf
    %41 = vmax.xlane.f32.xlu0 %v40
    %v42 = vpop.xlane.xlu0 %41
    %v43 = vlaneseq
    %v44 = vand.u32 %v43, 127
    %vm45 = vcmp.eq.f32.partialorder %v30, %v39
    %vm46 = vcmp.eq.f32.partialorder %v31, %v42
    %v47 = vsel %vm45, %v44, 64
    %v48 = vsel %vm46, %v44, 64
    %v49 = vsel %vm36, %v47, 2147483647
    %v50 = vand.u32 %v49, 65535
    %v51 = vshra.s32 %v49, 16
    %v52 = vcvt.s32.f32 %v50
    %v53 = vcvt.s32.f32 %v51
    %54 = vmin.xlane.f32.xlu0 %v53
    %v55 = vpop.xlane.xlu0 %54
    %vm56 = vcmp.eq.f32.partialorder %v53, %v55
    %v57 = vsel %vm56, %v52, inf
    %58 = vmin.xlane.f32.xlu0 %v57
    %v59 = vpop.xlane.xlu0 %58
    %v60 = vcvt.f32.s32 %v59
    %v61 = vcvt.f32.s32 %v55
    %v62 = vshll.u32 %v61, 16
    %v63 = vadd.s32 %v62, %v60
    %v64 = vsel %vm36, %v48, 2147483647
    %v65 = vand.u32 %v64, 65535
    %v66 = vshra.s32 %v64, 16
    %v67 = vcvt.s32.f32 %v65
    %v68 = vcvt.s32.f32 %v66
    %69 = vmin.xlane.f32.xlu0 %v68
    %v70 = vpop.xlane.xlu0 %69
    %vm71 = vcmp.eq.f32.partialorder %v68, %v70
    %v72 = vsel %vm71, %v67, inf
    %73 = vmin.xlane.f32.xlu0 %v72
    %v74 = vpop.xlane.xlu0 %73
    %v75 = vcvt.f32.s32 %v74
    %v76 = vcvt.f32.s32 %v70
    %v77 = vshll.u32 %v76, 16
    %v78 = vadd.s32 %v77, %v75
    %v79 = vcvt.s32.f32 %v63
    %v80 = vcvt.s32.f32 %v78
    %vm81 = vcmask 392192
    %v82 = vsel %vm81, %v32, -inf
    %83 = vmax.xlane.f32.xlu0 %v82
    %v84 = vpop.xlane.xlu0 %83
    %v85 = vsel %vm81, %v33, -inf
    %86 = vmax.xlane.f32.xlu0 %v85
    %v87 = vpop.xlane.xlu0 %86
    %vm88 = vcmp.eq.f32.partialorder %v32, %v84
    %vm89 = vcmp.eq.f32.partialorder %v33, %v87
    %v90 = vsel %vm88, %v44, 48
    %v91 = vsel %vm89, %v44, 48
    %v92 = vsel %vm81, %v90, 2147483647
    %v93 = vand.u32 %v92, 65535
    %v94 = vshra.s32 %v92, 16
    %v95 = vcvt.s32.f32 %v93
    %v96 = vcvt.s32.f32 %v94
    %97 = vmin.xlane.f32.xlu0 %v96
    %v98 = vpop.xlane.xlu0 %97
    %vm99 = vcmp.eq.f32.partialorder %v96, %v98
    %v100 = vsel %vm99, %v95, inf
    %101 = vmin.xlane.f32.xlu0 %v100
    %v102 = vpop.xlane.xlu0 %101
    %v103 = vcvt.f32.s32 %v102
    %v104 = vcvt.f32.s32 %v98
    %v105 = vshll.u32 %v104, 16
    %v106 = vadd.s32 %v105, %v103
    %v107 = vsel %vm81, %v91, 2147483647
    %v108 = vand.u32 %v107, 65535
    %v109 = vshra.s32 %v107, 16
    %v110 = vcvt.s32.f32 %v108
    %v111 = vcvt.s32.f32 %v109
    %112 = vmin.xlane.f32.xlu0 %v111
    %v113 = vpop.xlane.xlu0 %112
    %vm114 = vcmp.eq.f32.partialorder %v111, %v113
    %v115 = vsel %vm114, %v110, inf
    %116 = vmin.xlane.f32.xlu0 %v115
    %v117 = vpop.xlane.xlu0 %116
    %v118 = vcvt.f32.s32 %v117
    %v119 = vcvt.f32.s32 %v113
    %v120 = vshll.u32 %v119, 16
    %v121 = vadd.s32 %v120, %v118
    %v122 = vcvt.s32.f32 %v106
    %v123 = vcvt.s32.f32 %v121
    %vm124 = vcmp.ne.f32.partialorder %v34, 0.0
    %vm125 = vcmp.ne.f32.partialorder %v35, 0.0
    %v126 = vsel %vm124, 1, 0
    %v127 = vsel %vm125, 1, 0
    %128 = vrot.lane.b32.xlu0 %v126, 127
    %v129 = vpop.permute.xlu0 %128
    %130 = vrot.lane.b32.xlu0 %v127, 127
    %v131 = vpop.permute.xlu0 %130
    %vm132 = vcmp.ne.s32.totalorder %v129, 0
    %vm133 = vcmp.ne.s32.totalorder %v131, 0
    %vm134 = vmand %vm124, %vm132
    %vm135 = vmand %vm125, %vm133
    %v136 = vsel %vm134, 1, 0
    %v137 = vsel %vm135, 1, 0
    %v138 = vcvt.s32.f32 %v136
    %v139 = vcvt.s32.f32 %v137
    %vm140 = vcmask 7168
    %v141 = vsel %vm140, %v138, 0.0
    %v142 = vrot.slane %v141, 4
    %v143 = vadd.f32 %v141, %v142
    %v144 = vrot.slane %v143, 2
    %v145 = vadd.f32 %v143, %v144
    %v146 = vrot.slane %v145, 1
    %v147 = vadd.f32 %v145, %v146
    %v148 = vsel %vm140, %v139, 0.0
    %v149 = vrot.slane %v148, 4
    %v150 = vadd.f32 %v148, %v149
    %v151 = vrot.slane %v150, 2
    %v152 = vadd.f32 %v150, %v151
    %v153 = vrot.slane %v152, 1
    %v154 = vadd.f32 %v152, %v153
    %v155 = vlaneseq
    %v156 = vshrl.u32 %v155, 7
    %vm157 = vcmp.le.s32.totalorder %v156, %v44
    %159 = vset.pattern.permute.xlu0 0
    %160 = vperm.xlu0 %159, %v138
    %v161 = vpop.permute.xlu0 %160
    %164 = vset.pattern.permute.xlu0 0
    %165 = vperm.xlu0 %164, %v139
    %v166 = vpop.permute.xlu0 %165
    %v168 = vsel %vm157, %v161, 0.0
    %v169 = vsel %vm157, %v166, 0.0
    %vm170 = vcmask 64512
    %v171 = vsel %vm170, %v168, 0.0
    %v172 = vrot.slane %v171, 4
    %v173 = vadd.f32 %v171, %v172
    %v174 = vrot.slane %v173, 2
    %v175 = vadd.f32 %v173, %v174
    %v176 = vrot.slane %v175, 1
    %v177 = vadd.f32 %v175, %v176
    %v178 = vsel %vm170, %v169, 0.0
    %v179 = vrot.slane %v178, 4
    %v180 = vadd.f32 %v178, %v179
    %v181 = vrot.slane %v180, 2
    %v182 = vadd.f32 %v180, %v181
    %v183 = vrot.slane %v182, 1
    %v184 = vadd.f32 %v182, %v183
    %vm185 = vcmp.lt.s32.totalorder %v156, %v44
    %v186 = vsel %vm185, %v161, 0.0
    %v187 = vsel %vm185, %v166, 0.0
    %v188 = vsel %vm170, %v186, 0.0
    %v189 = vrot.slane %v188, 4
    %v190 = vadd.f32 %v188, %v189
    %v191 = vrot.slane %v190, 2
    %v192 = vadd.f32 %v190, %v191
    %v193 = vrot.slane %v192, 1
    %v194 = vadd.f32 %v192, %v193
    %v195 = vsel %vm170, %v187, 0.0
    %v196 = vrot.slane %v195, 4
    %v197 = vadd.f32 %v195, %v196
    %v198 = vrot.slane %v197, 2
    %v199 = vadd.f32 %v197, %v198
    %v200 = vrot.slane %v199, 1
    %v201 = vadd.f32 %v199, %v200
    %v202 = vcvt.s32.f32 %v156
    %vm203 = vcmp.eq.f32.partialorder %v194, %v202
    %vm204 = vcmp.eq.f32.partialorder %v201, %v202
    %v205 = vadd.f32 %v202, 1.0
    %vm206 = vcmp.eq.f32.partialorder %v177, %v205
    %vm207 = vcmp.eq.f32.partialorder %v184, %v205
    %vm208 = vmand %vm203, %vm206
    %vm209 = vmand %vm204, %vm207
    %v210 = vsel %vm208, 1, 0
    %v211 = vsel %vm209, 1, 0
    %v212 = vcvt.s32.f32 %v210
    %v213 = vcvt.s32.f32 %v211
    %216 = vrot.lane.b32.xlu0 %v34, 3
    %v217 = vpop.permute.xlu0 %216
    %218 = vrot.lane.b32.xlu0 %v35, 3
    %v219 = vpop.permute.xlu0 %218
    %v222 = vsel %vm140, %v202, %v79
    %v223 = vsel %vm140, %v202, %v80
    %vm224 = vcmask 15360
    %v225 = vsel %vm224, %v222, %v122
    %v226 = vsel %vm224, %v223, %v123
    %vm227 = vcmask 23552
    %v228 = vsel %vm227, %v225, %v217
    %v229 = vsel %vm227, %v226, %v219
    %v231 = vsel %vm170, %v212, 0
    %233 = vmatpush.msra.mxu0 0.0
    %234 = vmatpush.msra.mxu0 0.0
    %235 = vmatpush.msra.mxu0 0.0
    %236 = vmatpush.msra.mxu0 0.0
    %237 = vmatpush.msra.mxu0 0.0
    %238 = vmatpush.msra.mxu0 0.0
    %239 = vmatpush.msra.mxu0 0.0
    %240 = vmatpush.msra.mxu0 0.0
    %241 = vmatpush.msra.mxu0 0.0
    %242 = vmatpush.msra.mxu0 0.0
    %243 = vmatpush.msra.mxu0 0.0
    %244 = vmatpush.msra.mxu0 0.0
    %245 = vmatpush.msra.mxu0 0.0
    %246 = vmatpush.msra.mxu0 0.0
    %247 = vmatpush.msra.mxu0 0.0
    %v248 = vand.u32 %v228, 4294901760
    %249 = vmatpush.msra.mxu0 %v248
    %v250 = vand.u32 %v231, 4294901760
    %v251 = vsub.f32 %v231, %v250
    %v252 = vand.u32 %v251, 4294901760
    %v253 = vsub.f32 %v251, %v252
    %v254 = vand.u32 %v253, 4294901760
    %255 = vmatmul.f32.gmra.mxu0 %v254
    %v256 = vpop.f32.mrf.mxu0
    %v257 = vadd.f32 0.0, %v256
    %258 = vdwg.mxu0
    %259 = vmatpush.msra.mxu0 0.0
    %260 = vmatpush.msra.mxu0 0.0
    %261 = vmatpush.msra.mxu0 0.0
    %262 = vmatpush.msra.mxu0 0.0
    %263 = vmatpush.msra.mxu0 0.0
    %264 = vmatpush.msra.mxu0 0.0
    %265 = vmatpush.msra.mxu0 0.0
    %266 = vmatpush.msra.mxu0 0.0
    %267 = vmatpush.msra.mxu0 0.0
    %268 = vmatpush.msra.mxu0 0.0
    %269 = vmatpush.msra.mxu0 0.0
    %270 = vmatpush.msra.mxu0 0.0
    %271 = vmatpush.msra.mxu0 0.0
    %272 = vmatpush.msra.mxu0 0.0
    %273 = vmatpush.msra.mxu0 0.0
    %v274 = vand.u32 %v228, 4294901760
    %v275 = vsub.f32 %v228, %v274
    %v276 = vand.u32 %v275, 4294901760
    %v277 = vsub.f32 %v275, %v276
    %v278 = vand.u32 %v277, 4294901760
    %279 = vmatpush.msra.mxu0 %v278
    %v280 = vand.u32 %v231, 4294901760
    %281 = vmatmul.f32.gmra.mxu0 %v280
    %v282 = vpop.f32.mrf.mxu0
    %v283 = vadd.f32 %v257, %v282
    %284 = vdwg.mxu0
    %285 = vmatpush.msra.mxu0 0.0
    %286 = vmatpush.msra.mxu0 0.0
    %287 = vmatpush.msra.mxu0 0.0
    %288 = vmatpush.msra.mxu0 0.0
    %289 = vmatpush.msra.mxu0 0.0
    %290 = vmatpush.msra.mxu0 0.0
    %291 = vmatpush.msra.mxu0 0.0
    %292 = vmatpush.msra.mxu0 0.0
    %293 = vmatpush.msra.mxu0 0.0
    %294 = vmatpush.msra.mxu0 0.0
    %295 = vmatpush.msra.mxu0 0.0
    %296 = vmatpush.msra.mxu0 0.0
    %297 = vmatpush.msra.mxu0 0.0
    %298 = vmatpush.msra.mxu0 0.0
    %299 = vmatpush.msra.mxu0 0.0
    %v300 = vand.u32 %v228, 4294901760
    %v301 = vsub.f32 %v228, %v300
    %302 = vmatpush.msra.mxu0 %v301
    %v303 = vand.u32 %v231, 4294901760
    %v304 = vsub.f32 %v231, %v303
    %305 = vmatmul.f32.gmra.mxu0 %v304
    %v306 = vpop.f32.mrf.mxu0
    %v307 = vadd.f32 %v283, %v306
    %308 = vdwg.mxu0
    %309 = vmatpush.msra.mxu0 0.0
    %310 = vmatpush.msra.mxu0 0.0
    %311 = vmatpush.msra.mxu0 0.0
    %312 = vmatpush.msra.mxu0 0.0
    %313 = vmatpush.msra.mxu0 0.0
    %314 = vmatpush.msra.mxu0 0.0
    %315 = vmatpush.msra.mxu0 0.0
    %316 = vmatpush.msra.mxu0 0.0
    %317 = vmatpush.msra.mxu0 0.0
    %318 = vmatpush.msra.mxu0 0.0
    %319 = vmatpush.msra.mxu0 0.0
    %320 = vmatpush.msra.mxu0 0.0
    %321 = vmatpush.msra.mxu0 0.0
    %322 = vmatpush.msra.mxu0 0.0
    %323 = vmatpush.msra.mxu0 0.0
    %v324 = vand.u32 %v228, 4294901760
    %325 = vmatpush.msra.mxu0 %v324
    %v326 = vand.u32 %v231, 4294901760
    %v327 = vsub.f32 %v231, %v326
    %v328 = vand.u32 %v327, 4294901760
    %329 = vmatmul.f32.gmra.mxu0 %v328
    %v330 = vpop.f32.mrf.mxu0
    %v331 = vadd.f32 %v307, %v330
    %332 = vdwg.mxu0
    %333 = vmatpush.msra.mxu0 0.0
    %334 = vmatpush.msra.mxu0 0.0
    %335 = vmatpush.msra.mxu0 0.0
    %336 = vmatpush.msra.mxu0 0.0
    %337 = vmatpush.msra.mxu0 0.0
    %338 = vmatpush.msra.mxu0 0.0
    %339 = vmatpush.msra.mxu0 0.0
    %340 = vmatpush.msra.mxu0 0.0
    %341 = vmatpush.msra.mxu0 0.0
    %342 = vmatpush.msra.mxu0 0.0
    %343 = vmatpush.msra.mxu0 0.0
    %344 = vmatpush.msra.mxu0 0.0
    %345 = vmatpush.msra.mxu0 0.0
    %346 = vmatpush.msra.mxu0 0.0
    %347 = vmatpush.msra.mxu0 0.0
    %v348 = vand.u32 %v228, 4294901760
    %v349 = vsub.f32 %v228, %v348
    %v350 = vand.u32 %v349, 4294901760
    %351 = vmatpush.msra.mxu0 %v350
    %v352 = vand.u32 %v231, 4294901760
    %353 = vmatmul.f32.gmra.mxu0 %v352
    %v354 = vpop.f32.mrf.mxu0
    %v355 = vadd.f32 %v331, %v354
    %356 = vdwg.mxu0
    %357 = vmatpush.msra.mxu0 0.0
    %358 = vmatpush.msra.mxu0 0.0
    %359 = vmatpush.msra.mxu0 0.0
    %360 = vmatpush.msra.mxu0 0.0
    %361 = vmatpush.msra.mxu0 0.0
    %362 = vmatpush.msra.mxu0 0.0
    %363 = vmatpush.msra.mxu0 0.0
    %364 = vmatpush.msra.mxu0 0.0
    %365 = vmatpush.msra.mxu0 0.0
    %366 = vmatpush.msra.mxu0 0.0
    %367 = vmatpush.msra.mxu0 0.0
    %368 = vmatpush.msra.mxu0 0.0
    %369 = vmatpush.msra.mxu0 0.0
    %370 = vmatpush.msra.mxu0 0.0
    %371 = vmatpush.msra.mxu0 0.0
    %v372 = vand.u32 %v228, 4294901760
    %373 = vmatpush.msra.mxu0 %v372
    %v374 = vand.u32 %v231, 4294901760
    %375 = vmatmul.f32.gmra.mxu0 %v374
    %v376 = vpop.f32.mrf.mxu0
    %v377 = vadd.f32 %v355, %v376
    %378 = vdwg.mxu0
    %v380 = vsel %vm170, %v213, 0
    %382 = vmatpush.msra.mxu0 0.0
    %383 = vmatpush.msra.mxu0 0.0
    %384 = vmatpush.msra.mxu0 0.0
    %385 = vmatpush.msra.mxu0 0.0
    %386 = vmatpush.msra.mxu0 0.0
    %387 = vmatpush.msra.mxu0 0.0
    %388 = vmatpush.msra.mxu0 0.0
    %389 = vmatpush.msra.mxu0 0.0
    %390 = vmatpush.msra.mxu0 0.0
    %391 = vmatpush.msra.mxu0 0.0
    %392 = vmatpush.msra.mxu0 0.0
    %393 = vmatpush.msra.mxu0 0.0
    %394 = vmatpush.msra.mxu0 0.0
    %395 = vmatpush.msra.mxu0 0.0
    %396 = vmatpush.msra.mxu0 0.0
    %v397 = vand.u32 %v229, 4294901760
    %398 = vmatpush.msra.mxu0 %v397
    %v399 = vand.u32 %v380, 4294901760
    %v400 = vsub.f32 %v380, %v399
    %v401 = vand.u32 %v400, 4294901760
    %v402 = vsub.f32 %v400, %v401
    %v403 = vand.u32 %v402, 4294901760
    %404 = vmatmul.f32.gmra.mxu0 %v403
    %v405 = vpop.f32.mrf.mxu0
    %v406 = vadd.f32 0.0, %v405
    %407 = vdwg.mxu0
    %408 = vmatpush.msra.mxu0 0.0
    %409 = vmatpush.msra.mxu0 0.0
    %410 = vmatpush.msra.mxu0 0.0
    %411 = vmatpush.msra.mxu0 0.0
    %412 = vmatpush.msra.mxu0 0.0
    %413 = vmatpush.msra.mxu0 0.0
    %414 = vmatpush.msra.mxu0 0.0
    %415 = vmatpush.msra.mxu0 0.0
    %416 = vmatpush.msra.mxu0 0.0
    %417 = vmatpush.msra.mxu0 0.0
    %418 = vmatpush.msra.mxu0 0.0
    %419 = vmatpush.msra.mxu0 0.0
    %420 = vmatpush.msra.mxu0 0.0
    %421 = vmatpush.msra.mxu0 0.0
    %422 = vmatpush.msra.mxu0 0.0
    %v423 = vand.u32 %v229, 4294901760
    %v424 = vsub.f32 %v229, %v423
    %v425 = vand.u32 %v424, 4294901760
    %v426 = vsub.f32 %v424, %v425
    %v427 = vand.u32 %v426, 4294901760
    %428 = vmatpush.msra.mxu0 %v427
    %v429 = vand.u32 %v380, 4294901760
    %430 = vmatmul.f32.gmra.mxu0 %v429
    %v431 = vpop.f32.mrf.mxu0
    %v432 = vadd.f32 %v406, %v431
    %433 = vdwg.mxu0
    %434 = vmatpush.msra.mxu0 0.0
    %435 = vmatpush.msra.mxu0 0.0
    %436 = vmatpush.msra.mxu0 0.0
    %437 = vmatpush.msra.mxu0 0.0
    %438 = vmatpush.msra.mxu0 0.0
    %439 = vmatpush.msra.mxu0 0.0
    %440 = vmatpush.msra.mxu0 0.0
    %441 = vmatpush.msra.mxu0 0.0
    %442 = vmatpush.msra.mxu0 0.0
    %443 = vmatpush.msra.mxu0 0.0
    %444 = vmatpush.msra.mxu0 0.0
    %445 = vmatpush.msra.mxu0 0.0
    %446 = vmatpush.msra.mxu0 0.0
    %447 = vmatpush.msra.mxu0 0.0
    %448 = vmatpush.msra.mxu0 0.0
    %v449 = vand.u32 %v229, 4294901760
    %v450 = vsub.f32 %v229, %v449
    %451 = vmatpush.msra.mxu0 %v450
    %v452 = vand.u32 %v380, 4294901760
    %v453 = vsub.f32 %v380, %v452
    %454 = vmatmul.f32.gmra.mxu0 %v453
    %v455 = vpop.f32.mrf.mxu0
    %v456 = vadd.f32 %v432, %v455
    %457 = vdwg.mxu0
    %458 = vmatpush.msra.mxu0 0.0
    %459 = vmatpush.msra.mxu0 0.0
    %460 = vmatpush.msra.mxu0 0.0
    %461 = vmatpush.msra.mxu0 0.0
    %462 = vmatpush.msra.mxu0 0.0
    %463 = vmatpush.msra.mxu0 0.0
    %464 = vmatpush.msra.mxu0 0.0
    %465 = vmatpush.msra.mxu0 0.0
    %466 = vmatpush.msra.mxu0 0.0
    %467 = vmatpush.msra.mxu0 0.0
    %468 = vmatpush.msra.mxu0 0.0
    %469 = vmatpush.msra.mxu0 0.0
    %470 = vmatpush.msra.mxu0 0.0
    %471 = vmatpush.msra.mxu0 0.0
    %472 = vmatpush.msra.mxu0 0.0
    %v473 = vand.u32 %v229, 4294901760
    %474 = vmatpush.msra.mxu0 %v473
    %v475 = vand.u32 %v380, 4294901760
    %v476 = vsub.f32 %v380, %v475
    %v477 = vand.u32 %v476, 4294901760
    %478 = vmatmul.f32.gmra.mxu0 %v477
    %v479 = vpop.f32.mrf.mxu0
    %v480 = vadd.f32 %v456, %v479
    %481 = vdwg.mxu0
    %482 = vmatpush.msra.mxu0 0.0
    %483 = vmatpush.msra.mxu0 0.0
    %484 = vmatpush.msra.mxu0 0.0
    %485 = vmatpush.msra.mxu0 0.0
    %486 = vmatpush.msra.mxu0 0.0
    %487 = vmatpush.msra.mxu0 0.0
    %488 = vmatpush.msra.mxu0 0.0
    %489 = vmatpush.msra.mxu0 0.0
    %490 = vmatpush.msra.mxu0 0.0
    %491 = vmatpush.msra.mxu0 0.0
    %492 = vmatpush.msra.mxu0 0.0
    %493 = vmatpush.msra.mxu0 0.0
    %494 = vmatpush.msra.mxu0 0.0
    %495 = vmatpush.msra.mxu0 0.0
    %496 = vmatpush.msra.mxu0 0.0
    %v497 = vand.u32 %v229, 4294901760
    %v498 = vsub.f32 %v229, %v497
    %v499 = vand.u32 %v498, 4294901760
    %500 = vmatpush.msra.mxu0 %v499
    %v501 = vand.u32 %v380, 4294901760
    %502 = vmatmul.f32.gmra.mxu0 %v501
    %v503 = vpop.f32.mrf.mxu0
    %v504 = vadd.f32 %v480, %v503
    %505 = vdwg.mxu0
    %506 = vmatpush.msra.mxu0 0.0
    %507 = vmatpush.msra.mxu0 0.0
    %508 = vmatpush.msra.mxu0 0.0
    %509 = vmatpush.msra.mxu0 0.0
    %510 = vmatpush.msra.mxu0 0.0
    %511 = vmatpush.msra.mxu0 0.0
    %512 = vmatpush.msra.mxu0 0.0
    %513 = vmatpush.msra.mxu0 0.0
    %514 = vmatpush.msra.mxu0 0.0
    %515 = vmatpush.msra.mxu0 0.0
    %516 = vmatpush.msra.mxu0 0.0
    %517 = vmatpush.msra.mxu0 0.0
    %518 = vmatpush.msra.mxu0 0.0
    %519 = vmatpush.msra.mxu0 0.0
    %520 = vmatpush.msra.mxu0 0.0
    %v521 = vand.u32 %v229, 4294901760
    %522 = vmatpush.msra.mxu0 %v521
    %v523 = vand.u32 %v380, 4294901760
    %524 = vmatmul.f32.gmra.mxu0 %v523
    %v525 = vpop.f32.mrf.mxu0
    %v526 = vadd.f32 %v504, %v525
    %527 = vdwg.mxu0
    %v530 = vrot.slane %v377, 7
    %v531 = vrot.slane %v526, 7
    %v534 = vsub.f32 %v377, %v530
    %v535 = vsub.f32 %v526, %v531
    %v536 = vrcp.pop 25.0
    %v537 = vmul.f32 25.0, %v536
    %v538 = vsub.f32 1.0, %v537
    %v539 = vmul.f32 %v536, %v538
    %v540 = vadd.f32 %v536, %v539
    %vm541 = vweird.f32 %v536
    %v542 = vsel %vm541, %v536, %v540
    %v543 = vmul.f32 %v534, %v542
    %v544 = vmul.f32 %v535, %v542
    %v545 = vsub.f32 %v147, 1.0
    %v546 = vsub.f32 %v154, 1.0
    %vm547 = vcmp.lt.f32.partialorder %v202, %v545
    %vm548 = vcmp.lt.f32.partialorder %v202, %v546
    %v551 = vrot.slane %v543, 1
    %v552 = vrot.slane %v544, 1
    %v555 = vsel %vm547, %v551, 1.0
    %v556 = vsel %vm548, %v552, 1.0
    %v557 = vsub.f32 %v147, 2.0
    %v558 = vsub.f32 %v154, 2.0
    %vm559 = vcmp.lt.f32.partialorder %v202, %v557
    %vm560 = vcmp.lt.f32.partialorder %v202, %v558
    %v561 = vrot.slane %v543, 2
    %v562 = vrot.slane %v544, 2
    %v565 = vsel %vm559, %v561, 1.0
    %v566 = vsel %vm560, %v562, 1.0
    %568 = vset.pattern.permute.xlu0 0
    %569 = vperm.xlu0 %568, %v555
    %v570 = vpop.permute.xlu0 %569
    %572 = vset.pattern.permute.xlu0 0
    %573 = vperm.xlu0 %572, %v556
    %v574 = vpop.permute.xlu0 %573
    %v575 = vrot.slane %v570, 7
    %v576 = vrot.slane %v574, 7
    %v579 = vrcp.pop %v575
    %v580 = vmul.f32 %v575, %v579
    %v581 = vsub.f32 1.0, %v580
    %v582 = vmul.f32 %v579, %v581
    %v583 = vadd.f32 %v579, %v582
    %vm584 = vweird.f32 %v575
    %vm585 = vweird.f32 %v579
    %vm586 = vmor %vm584, %vm585
    %v587 = vsel %vm586, %v579, %v583
    %v588 = vand.u32 2147483647, %v575
    %vm589 = vcmp.eq.f32.partialorder %v588, 8.507059e+37
    %v590 = vand.u32 %v575, 2147483648
    %v591 = vor.u32 1.1754944e-38, %v590
    %v592 = vsel %vm589, %v591, %v587
    %v593 = vmul.f32 %v534, %v592
    %v594 = vrcp.pop %v576
    %v595 = vmul.f32 %v576, %v594
    %v596 = vsub.f32 1.0, %v595
    %v597 = vmul.f32 %v594, %v596
    %v598 = vadd.f32 %v594, %v597
    %vm599 = vweird.f32 %v576
    %vm600 = vweird.f32 %v594
    %vm601 = vmor %vm599, %vm600
    %v602 = vsel %vm601, %v594, %v598
    %v603 = vand.u32 2147483647, %v576
    %vm604 = vcmp.eq.f32.partialorder %v603, 8.507059e+37
    %v605 = vand.u32 %v576, 2147483648
    %v606 = vor.u32 1.1754944e-38, %v605
    %v607 = vsel %vm604, %v606, %v602
    %v608 = vmul.f32 %v535, %v607
    %v609 = vsel %vm547, 1, 0
    %v610 = vsel %vm548, 1, 0
    %611 = vset.pattern.permute.xlu0 0
    %612 = vperm.xlu0 %611, %v609
    %v613 = vpop.permute.xlu0 %612
    %614 = vset.pattern.permute.xlu0 0
    %615 = vperm.xlu0 %614, %v610
    %v616 = vpop.permute.xlu0 %615
    %vm617 = vcmp.eq.s32.totalorder %v613, 1
    %vm618 = vcmp.eq.s32.totalorder %v616, 1
    %v621 = vrot.slane %v593, 1
    %v622 = vrot.slane %v608, 1
    %623 = vrot.lane.b32.xlu0 %v621, 127
    %v624 = vpop.permute.xlu0 %623
    %625 = vrot.lane.b32.xlu0 %v622, 127
    %v626 = vpop.permute.xlu0 %625
    %v629 = vsel %vm617, %v624, 0.0
    %v630 = vsel %vm618, %v626, 0.0
    %v633 = vrot.slane %v629, 7
    %v634 = vrot.slane %v630, 7
    %v637 = vsub.f32 %v629, %v633
    %v638 = vsub.f32 %v630, %v634
    %640 = vset.pattern.permute.xlu0 0
    %641 = vperm.xlu0 %640, %v565
    %v642 = vpop.permute.xlu0 %641
    %644 = vset.pattern.permute.xlu0 0
    %645 = vperm.xlu0 %644, %v566
    %v646 = vpop.permute.xlu0 %645
    %v647 = vrot.slane %v642, 7
    %v648 = vrot.slane %v646, 7
    %v651 = vrcp.pop %v647
    %v652 = vmul.f32 %v647, %v651
    %v653 = vsub.f32 1.0, %v652
    %v654 = vmul.f32 %v651, %v653
    %v655 = vadd.f32 %v651, %v654
    %vm656 = vweird.f32 %v647
    %vm657 = vweird.f32 %v651
    %vm658 = vmor %vm656, %vm657
    %v659 = vsel %vm658, %v651, %v655
    %v660 = vand.u32 2147483647, %v647
    %vm661 = vcmp.eq.f32.partialorder %v660, 8.507059e+37
    %v662 = vand.u32 %v647, 2147483648
    %v663 = vor.u32 1.1754944e-38, %v662
    %v664 = vsel %vm661, %v663, %v659
    %v665 = vmul.f32 %v637, %v664
    %v666 = vrcp.pop %v648
    %v667 = vmul.f32 %v648, %v666
    %v668 = vsub.f32 1.0, %v667
    %v669 = vmul.f32 %v666, %v668
    %v670 = vadd.f32 %v666, %v669
    %vm671 = vweird.f32 %v648
    %vm672 = vweird.f32 %v666
    %vm673 = vmor %vm671, %vm672
    %v674 = vsel %vm673, %v666, %v670
    %v675 = vand.u32 2147483647, %v648
    %vm676 = vcmp.eq.f32.partialorder %v675, 8.507059e+37
    %v677 = vand.u32 %v648, 2147483648
    %v678 = vor.u32 1.1754944e-38, %v677
    %v679 = vsel %vm676, %v678, %v674
    %v680 = vmul.f32 %v638, %v679
    %v681 = vsel %vm559, 1, 0
    %v682 = vsel %vm560, 1, 0
    %683 = vset.pattern.permute.xlu0 0
    %684 = vperm.xlu0 %683, %v681
    %v685 = vpop.permute.xlu0 %684
    %686 = vset.pattern.permute.xlu0 0
    %687 = vperm.xlu0 %686, %v682
    %v688 = vpop.permute.xlu0 %687
    %vm689 = vcmp.eq.s32.totalorder %v685, 1
    %vm690 = vcmp.eq.s32.totalorder %v688, 1
    %v693 = vrot.slane %v665, 1
    %v694 = vrot.slane %v680, 1
    %v697 = vsel %vm689, %v693, 0.0
    %v698 = vsel %vm690, %v694, 0.0
    %699 = vrot.lane.b32.xlu0 %v621, 125
    %v700 = vpop.permute.xlu0 %699
    %701 = vrot.lane.b32.xlu0 %v622, 125
    %v702 = vpop.permute.xlu0 %701
    %v705 = vsel %vm617, %v700, 0.0
    %v706 = vsel %vm618, %v702, 0.0
    %v709 = vrot.slane %v705, 7
    %v710 = vrot.slane %v706, 7
    %v713 = vsub.f32 %v705, %v709
    %v714 = vsub.f32 %v706, %v710
    %v715 = vmul.f32 %v713, %v664
    %v716 = vmul.f32 %v714, %v679
    %v719 = vrot.slane %v715, 1
    %v720 = vrot.slane %v716, 1
    %v723 = vsel %vm689, %v719, 0.0
    %v724 = vsel %vm690, %v720, 0.0
    %v725 = vsub.f32 %v629, %v705
    %v726 = vsub.f32 %v630, %v706
    %v727 = vmul.f32 %v725, %v725
    %v728 = vmul.f32 %v726, %v726
    %v729 = vrot.slane %v161, 1
    %v730 = vrot.slane %v166, 1
    %v733 = vmul.f32 %v727, %v729
    %v734 = vmul.f32 %v728, %v730
    %vm735 = vcmask 14336
    %v736 = vsel %vm735, %v733, 0.0
    %v737 = vsel %vm735, %v734, 0.0
    %v738 = vadd.f32 %v736, %v737
    %739 = vadd.xlane.f32.xlu0 %v738
    %v740 = vpop.xlane.xlu0 %739
    %v741 = vrot.slane %v740, 4
    %v742 = vadd.f32 %v740, %v741
    %v743 = vrot.slane %v742, 2
    %v744 = vadd.f32 %v742, %v743
    %v745 = vrot.slane %v744, 1
    %v746 = vadd.f32 %v744, %v745
    %s747 = vtos %v746
    %v748 = vrot.slane %v138, 1
    %v749 = vrot.slane %v139, 1
    %vm752 = vcmask 6144
    %v753 = vsel %vm752, %v748, 0.0
    %v754 = vsel %vm752, %v749, 0.0
    %v755 = vadd.f32 %v753, %v754
    %756 = vadd.xlane.f32.xlu0 %v755
    %v757 = vpop.xlane.xlu0 %756
    %v758 = vrot.slane %v757, 4
    %v759 = vadd.f32 %v757, %v758
    %v760 = vrot.slane %v759, 2
    %v761 = vadd.f32 %v759, %v760
    %v762 = vrot.slane %v761, 1
    %v763 = vadd.f32 %v761, %v762
    %s764 = vtos %v763
    %v765 = vsub.f32 %v697, %v723
    %v766 = vsub.f32 %v698, %v724
    %v767 = vmul.f32 %v765, %v765
    %v768 = vmul.f32 %v766, %v766
    %v769 = vrot.slane %v161, 2
    %v770 = vrot.slane %v166, 2
    %v773 = vmul.f32 %v767, %v769
    %v774 = vmul.f32 %v768, %v770
    %vm775 = vcmask 13312
    %v776 = vsel %vm775, %v773, 0.0
    %v777 = vsel %vm775, %v774, 0.0
    %v778 = vadd.f32 %v776, %v777
    %779 = vadd.xlane.f32.xlu0 %v778
    %v780 = vpop.xlane.xlu0 %779
    %v781 = vrot.slane %v780, 4
    %v782 = vadd.f32 %v780, %v781
    %v783 = vrot.slane %v782, 2
    %v784 = vadd.f32 %v782, %v783
    %v785 = vrot.slane %v784, 1
    %v786 = vadd.f32 %v784, %v785
    %s787 = vtos %v786
    %v788 = vrot.slane %v138, 2
    %v789 = vrot.slane %v139, 2
    %vm792 = vcmask 5120
    %v793 = vsel %vm792, %v788, 0.0
    %v794 = vsel %vm792, %v789, 0.0
    %v795 = vadd.f32 %v793, %v794
    %796 = vadd.xlane.f32.xlu0 %v795
    %v797 = vpop.xlane.xlu0 %796
    %v798 = vrot.slane %v797, 4
    %v799 = vadd.f32 %v797, %v798
    %v800 = vrot.slane %v799, 2
    %v801 = vadd.f32 %v799, %v800
    %v802 = vrot.slane %v801, 1
    %v803 = vadd.f32 %v801, %v802
    %s804 = vtos %v803
    %vm805 = vcmp.eq.s32.totalorder %v44, 0
    %vm806 = vcmp.eq.s32.totalorder %v44, 1
    %vm807 = vcmp.eq.s32.totalorder %v44, 2
    %v808 = vstv %s787
    %v809 = vstv %s804
    %v810 = vsel %vm807, %v808, %v809
    %v811 = vstv %s764
    %v812 = vsel %vm806, %v811, %v810
    %v813 = vstv %s747
    %v814 = vsel %vm805, %v813, %v812
    %vm815 = vcmask 24576
    %816 = vst.msk [vmem:[%s3] sm:$0x1] %vm815, %v814
    // Predicated region
    $region18: #{physics_loss.1} parent=1 // pred_check
      _
    $region19: #{physics_loss.1} parent=1 // pred_check_branch
      %818 = sbr.rel (0) target = $region21
    $region20: #{physics_loss.1} parent=1 // pred_region
      _
    $region21: #{physics_loss.1} parent=1 // pred_fallthru
      _
    // Predicated region
    $region22: #{physics_loss.1} parent=1 // pred_check
      _
    $region23: #{physics_loss.1} parent=1 // pred_check_branch
      %820 = sbr.rel (0) target = $region25
    $region24: #{physics_loss.1} parent=1 // pred_region
      _
    $region25: #{physics_loss.1} parent=1 // pred_fallthru
      _
    %821 = vsyncpa [#allocation3], 1

</llo_original>
